<compile_context>
chip_gen: v7x
topology: tpu7x:2x2x1
jax: 0.10.0
libtpu: 0.0.40
codegen_flags: <defaults>
</compile_context>

<pallas_src>
import functools

import jax
import jax.numpy as jnp
from jax import lax
from jax.experimental import pallas as pl
from jax.experimental.pallas import tpu as pltpu


# ----------------------------------------------------------------------------
# Single-invocation Pallas kernel: input-projection prologue + unrolled GRU
# recurrence + final hid2lat Linear.
# ----------------------------------------------------------------------------
def _gru_encoder_kernel(
    xt2_ref,     # (T*B, D1)  flattened (time-major) concat(x, dt)
    w_x_ref,     # (D1, 3H)   fused input weights  [r | z | n]
    b_i3_ref,    # (1, 3H)    fused biases [b_ir+b_hr | b_iz+b_hz | b_in]
    w_h_ref,     # (H, 3H)    fused recurrent weights [r | z | n]
    b_hn_ref,    # (1, H)     recurrent bias of the n-gate (stays inside r*(...))
    w_lat_ref,   # (H, 2L)    hid2lat weight (transposed)
    b_lat_ref,   # (1, 2L)    hid2lat bias
    z0_ref,      # (B, 2L)    output
):
    B = z0_ref.shape[0]
    H = w_h_ref.shape[0]
    T = xt2_ref.shape[0] // B

    # --- Prologue: all input projections hoisted into ONE matmul -------------
    # (independent of the hidden state, so it does not belong in the loop)
    gi_all = (
        jnp.dot(xt2_ref[...], w_x_ref[...], preferred_element_type=jnp.float32)
        + b_i3_ref[...]
    )  # (T*B, 3H)

    w_h = w_h_ref[...]      # (H, 3H)
    b_hn = b_hn_ref[...]    # (1, H)

    # --- Recurrence: fully unrolled (T is small & static), reversed order ----
    h = jnp.zeros((B, H), jnp.float32)
    for s in range(T):
        row = (T - 1 - s) * B                     # flip((0,)) via reversed chunks
        gi = gi_all[row:row + B, :]               # (B, 3H), static slice
        gh = jnp.dot(h, w_h, preferred_element_type=jnp.float32)  # (B, 3H)
        r = jax.nn.sigmoid(gi[:, :H] + gh[:, :H])
        z = jax.nn.sigmoid(gi[:, H:2 * H] + gh[:, H:2 * H])
        n = jnp.tanh(gi[:, 2 * H:] + r * (gh[:, 2 * H:] + b_hn))
        h = (1.0 - z) * n + z * h

    # --- Head: hid2lat Linear -------------------------------------------------
    z0_ref[...] = (
        jnp.dot(h, w_lat_ref[...], preferred_element_type=jnp.float32)
        + b_lat_ref[...]
    )


def _pallas_gru_encoder(xt, kparams):
    """xt: (T, B, D+1).  Runs the whole encoder in one grid-less pallas_call."""
    T, B, D1 = xt.shape
    w_x, b_i3, w_h, b_hn, w_lat, b_lat = kparams
    L2 = w_lat.shape[1]

    xt2 = xt.reshape(T * B, D1)   # cheap XLA reshape; kernel wants a 2-D matmul

    vmem = lambda: pl.BlockSpec(memory_space=pltpu.MemorySpace.VMEM)
    z0 = pl.pallas_call(
        _gru_encoder_kernel,
        out_shape=jax.ShapeDtypeStruct((B, L2), jnp.float32),
        in_specs=[vmem() for _ in range(7)],   # whole arrays resident in VMEM
        out_specs=vmem(),
    )(xt2, w_x, b_i3, w_h, b_hn, w_lat, b_lat)
    return z0


# ----------------------------------------------------------------------------
# Module-level wrapper reproducing RNNEncoder.forward semantics.
# ----------------------------------------------------------------------------
def rnn_encoder_forward(x, t, params, hidden_dim, latent_dim):
    # t[1:] = t[:-1] - t[1:]; t[0] = 0   (tiny elementwise glue)
    t2 = t.at[1:].set(t[:-1] - t[1:])
    t2 = t2.at[0].set(0.0)
    xt = jnp.concatenate([x, t2], axis=-1)        # (T, B, D+1)

    z0 = _pallas_gru_encoder(xt, params["kernel"])
    z0_mean = z0[:, :latent_dim]
    z0_log_var = z0[:, latent_dim:]
    return z0_mean, z0_log_var


# ----------------------------------------------------------------------------
# Deterministic parameter init (PyTorch-style uniform(-1/sqrt(H), 1/sqrt(H))).
# Packs fused kernel params: W_x (D1,3H), b_i3 (1,3H), W_h (H,3H), b_hn (1,H).
# (bf16 weight storage would further help on v6e/v7x once H is scaled up;
#  kept f32 here since these shapes are latency-bound, not MXU/DMA-bound.)
# ----------------------------------------------------------------------------
def init_params(key, input_dim, hidden_dim, latent_dim):
    D1, H, L = input_dim + 1, hidden_dim, latent_dim
    k = 1.0 / jnp.sqrt(jnp.float32(H))
    ks = jax.random.split(key, 6)
    u = lambda kk, shp: jax.random.uniform(kk, shp, jnp.float32, -k, k)

    w_ih = u(ks[0], (3 * H, D1))   # gate order: r, z, n (PyTorch convention)
    w_hh = u(ks[1], (3 * H, H))
    b_ih = u(ks[2], (3 * H,))
    b_hh = u(ks[3], (3 * H,))
    w_lat = u(ks[4], (2 * L, H))
    b_lat = u(ks[5], (2 * L,))

    # Fused, x @ W layout.
    w_x = w_ih.T                                           # (D1, 3H)
    b_i3 = jnp.concatenate(
        [b_ih[:H] + b_hh[:H],
         b_ih[H:2 * H] + b_hh[H:2 * H],
         b_ih[2 * H:]]).reshape(1, 3 * H)                  # (1, 3H)
    w_h = w_hh.T                                           # (H, 3H)
    b_hn = b_hh[2 * H:].reshape(1, H)                      # (1, H)

    kernel_params = (w_x, b_i3, w_h, b_hn, w_lat.T, b_lat.reshape(1, 2 * L))
    raw = dict(w_ih=w_ih, w_hh=w_hh, b_ih=b_ih, b_hh=b_hh,
               w_lat=w_lat, b_lat=b_lat)
    return {"kernel": kernel_params, "raw": raw}


# ----------------------------------------------------------------------------
# Pure-JAX reference (mirrors torch.nn.GRU math) for correctness checking.
# ----------------------------------------------------------------------------
def rnn_encoder_ref(x, t, raw, hidden_dim, latent_dim):
    H = hidden_dim
    t2 = t.at[1:].set(t[:-1] - t[1:])
    t2 = t2.at[0].set(0.0)
    xt = jnp.concatenate([x, t2], axis=-1)[::-1]   # flip along seq

    w_ih, w_hh, b_ih, b_hh = raw["w_ih"], raw["w_hh"], raw["b_ih"], raw["b_hh"]

    def step(h, xc):
        gi = xc @ w_ih.T + b_ih
        gh = h @ w_hh.T + b_hh
        r = jax.nn.sigmoid(gi[:, :H] + gh[:, :H])
        z = jax.nn.sigmoid(gi[:, H:2 * H] + gh[:, H:2 * H])
        n = jnp.tanh(gi[:, 2 * H:] + r * gh[:, 2 * H:])
        return (1.0 - z) * n + z * h, None

    h0, _ = lax.scan(step, jnp.zeros((x.shape[1], H), jnp.float32), xt)
    z0 = h0 @ raw["w_lat"].T + raw["b_lat"]
    return z0[:, :latent_dim], z0[:, latent_dim:]


if __name__ == "__main__":
    SEQ, BATCH = 8, 8          # batch = 8 -> full sublane / MXU-row utilisation
    INPUT_DIM, HIDDEN_DIM, LATENT_DIM = 8, 32, 6

    key = jax.random.PRNGKey(0)
    kx, kt, kp = jax.random.split(key, 3)
    x = jax.random.normal(kx, (SEQ, BATCH, INPUT_DIM), jnp.float32)
    t = jnp.sort(jax.random.uniform(kt, (SEQ, BATCH, 1), jnp.float32), axis=0)

    params = init_params(kp, INPUT_DIM, HIDDEN_DIM, LATENT_DIM)

    fwd = jax.jit(functools.partial(
        rnn_encoder_forward, hidden_dim=HIDDEN_DIM, latent_dim=LATENT_DIM))
    z0_mean, z0_log_var = fwd(x, t, params)
    jax.block_until_ready((z0_mean, z0_log_var))

    # correctness check against pure-JAX reference
    ref_mean, ref_logvar = rnn_encoder_ref(
        x, t, params["raw"], HIDDEN_DIM, LATENT_DIM)
    assert z0_mean.shape == (BATCH, LATENT_DIM)
    assert z0_log_var.shape == (BATCH, LATENT_DIM)
    assert jnp.allclose(z0_mean, ref_mean, atol=1e-4, rtol=1e-4)
    assert jnp.allclose(z0_log_var, ref_logvar, atol=1e-4, rtol=1e-4)

    print("KERNEL_OK")
</pallas_src>

<mosaic_0001>
module attributes {stable_mosaic.version = 11 : i64} {
  func.func @_gru_encoder_kernel(%arg0: memref<64x9xf32, #tpu.memory_space<vmem>>, %arg1: memref<9x96xf32, #tpu.memory_space<vmem>>, %arg2: memref<1x96xf32, #tpu.memory_space<vmem>>, %arg3: memref<32x96xf32, #tpu.memory_space<vmem>>, %arg4: memref<1x32xf32, #tpu.memory_space<vmem>>, %arg5: memref<32x12xf32, #tpu.memory_space<vmem>>, %arg6: memref<1x12xf32, #tpu.memory_space<vmem>>, %arg7: memref<8x12xf32, #tpu.memory_space<vmem>>) attributes {dimension_semantics = [], scalar_prefetch = 0 : i64, scratch_operands = 0 : i64, tpu.core_type = #tpu.core_type<tc>} {
    %c0 = arith.constant 0 : index
    %c0_0 = arith.constant 0 : index
    %0 = vector.load %arg0[%c0, %c0_0] : memref<64x9xf32, #tpu.memory_space<vmem>>, vector<64x9xf32>
    %c0_1 = arith.constant 0 : index
    %c0_2 = arith.constant 0 : index
    %1 = vector.load %arg1[%c0_1, %c0_2] : memref<9x96xf32, #tpu.memory_space<vmem>>, vector<9x96xf32>
    %cst = arith.constant dense<0.000000e+00> : vector<64x96xf32>
    %2 = tpu.matmul %0, %1, %cst {dimension_numbers = #tpu.dot_dimension_numbers<[1], [0], [0], [1], [0, 0, 1, 1], [], []>} : vector<64x9xf32>, vector<9x96xf32>, vector<64x96xf32> -> vector<64x96xf32>
    %c0_3 = arith.constant 0 : index
    %c0_4 = arith.constant 0 : index
    %3 = vector.load %arg2[%c0_3, %c0_4] : memref<1x96xf32, #tpu.memory_space<vmem>>, vector<1x96xf32>
    %4 = vector.broadcast %3 : vector<1x96xf32> to vector<64x96xf32>
    %5 = arith.addf %2, %4 : vector<64x96xf32>
    %c0_5 = arith.constant 0 : index
    %c0_6 = arith.constant 0 : index
    %6 = vector.load %arg3[%c0_5, %c0_6] : memref<32x96xf32, #tpu.memory_space<vmem>>, vector<32x96xf32>
    %c0_7 = arith.constant 0 : index
    %c0_8 = arith.constant 0 : index
    %7 = vector.load %arg4[%c0_7, %c0_8] : memref<1x32xf32, #tpu.memory_space<vmem>>, vector<1x32xf32>
    %cst_9 = arith.constant 0.000000e+00 : f32
    %8 = vector.broadcast %cst_9 : f32 to vector<8x32xf32>
    %9 = vector.extract_strided_slice %5 {offsets = [56, 0], sizes = [8, 96], strides = [1, 1]} : vector<64x96xf32> to vector<8x96xf32>
    %cst_10 = arith.constant dense<0.000000e+00> : vector<8x96xf32>
    %10 = tpu.matmul %8, %6, %cst_10 {dimension_numbers = #tpu.dot_dimension_numbers<[1], [0], [0], [1], [0, 0, 1, 1], [], []>} : vector<8x32xf32>, vector<32x96xf32>, vector<8x96xf32> -> vector<8x96xf32>
    %11 = vector.extract_strided_slice %9 {offsets = [0, 0], sizes = [8, 32], strides = [1, 1]} : vector<8x96xf32> to vector<8x32xf32>
    %12 = vector.extract_strided_slice %10 {offsets = [0, 0], sizes = [8, 32], strides = [1, 1]} : vector<8x96xf32> to vector<8x32xf32>
    %13 = arith.addf %11, %12 : vector<8x32xf32>
    %14 = arith.negf %13 : vector<8x32xf32>
    %15 = math.exp %14 : vector<8x32xf32>
    %cst_11 = arith.constant 1.000000e+00 : f32
    %16 = vector.broadcast %cst_11 : f32 to vector<8x32xf32>
    %17 = arith.addf %16, %15 : vector<8x32xf32>
    %18 = arith.divf %16, %17 : vector<8x32xf32>
    %19 = vector.extract_strided_slice %9 {offsets = [0, 32], sizes = [8, 32], strides = [1, 1]} : vector<8x96xf32> to vector<8x32xf32>
    %20 = vector.extract_strided_slice %10 {offsets = [0, 32], sizes = [8, 32], strides = [1, 1]} : vector<8x96xf32> to vector<8x32xf32>
    %21 = arith.addf %19, %20 : vector<8x32xf32>
    %22 = arith.negf %21 : vector<8x32xf32>
    %23 = math.exp %22 : vector<8x32xf32>
    %cst_12 = arith.constant 1.000000e+00 : f32
    %24 = vector.broadcast %cst_12 : f32 to vector<8x32xf32>
    %25 = arith.addf %24, %23 : vector<8x32xf32>
    %26 = arith.divf %24, %25 : vector<8x32xf32>
    %27 = vector.extract_strided_slice %9 {offsets = [0, 64], sizes = [8, 32], strides = [1, 1]} : vector<8x96xf32> to vector<8x32xf32>
    %28 = vector.extract_strided_slice %10 {offsets = [0, 64], sizes = [8, 32], strides = [1, 1]} : vector<8x96xf32> to vector<8x32xf32>
    %29 = vector.broadcast %7 : vector<1x32xf32> to vector<8x32xf32>
    %30 = arith.addf %28, %29 : vector<8x32xf32>
    %31 = arith.mulf %18, %30 : vector<8x32xf32>
    %32 = arith.addf %27, %31 : vector<8x32xf32>
    %33 = math.tanh %32 : vector<8x32xf32>
    %cst_13 = arith.constant 1.000000e+00 : f32
    %34 = vector.broadcast %cst_13 : f32 to vector<8x32xf32>
    %35 = arith.subf %34, %26 : vector<8x32xf32>
    %36 = arith.mulf %35, %33 : vector<8x32xf32>
    %37 = arith.mulf %26, %8 : vector<8x32xf32>
    %38 = arith.addf %36, %37 : vector<8x32xf32>
    %39 = vector.extract_strided_slice %5 {offsets = [48, 0], sizes = [8, 96], strides = [1, 1]} : vector<64x96xf32> to vector<8x96xf32>
    %cst_14 = arith.constant dense<0.000000e+00> : vector<8x96xf32>
    %40 = tpu.matmul %38, %6, %cst_14 {dimension_numbers = #tpu.dot_dimension_numbers<[1], [0], [0], [1], [0, 0, 1, 1], [], []>} : vector<8x32xf32>, vector<32x96xf32>, vector<8x96xf32> -> vector<8x96xf32>
    %41 = vector.extract_strided_slice %39 {offsets = [0, 0], sizes = [8, 32], strides = [1, 1]} : vector<8x96xf32> to vector<8x32xf32>
    %42 = vector.extract_strided_slice %40 {offsets = [0, 0], sizes = [8, 32], strides = [1, 1]} : vector<8x96xf32> to vector<8x32xf32>
    %43 = arith.addf %41, %42 : vector<8x32xf32>
    %44 = arith.negf %43 : vector<8x32xf32>
    %45 = math.exp %44 : vector<8x32xf32>
    %cst_15 = arith.constant 1.000000e+00 : f32
    %46 = vector.broadcast %cst_15 : f32 to vector<8x32xf32>
    %47 = arith.addf %46, %45 : vector<8x32xf32>
    %48 = arith.divf %46, %47 : vector<8x32xf32>
    %49 = vector.extract_strided_slice %39 {offsets = [0, 32], sizes = [8, 32], strides = [1, 1]} : vector<8x96xf32> to vector<8x32xf32>
    %50 = vector.extract_strided_slice %40 {offsets = [0, 32], sizes = [8, 32], strides = [1, 1]} : vector<8x96xf32> to vector<8x32xf32>
    %51 = arith.addf %49, %50 : vector<8x32xf32>
    %52 = arith.negf %51 : vector<8x32xf32>
    %53 = math.exp %52 : vector<8x32xf32>
    %cst_16 = arith.constant 1.000000e+00 : f32
    %54 = vector.broadcast %cst_16 : f32 to vector<8x32xf32>
    %55 = arith.addf %54, %53 : vector<8x32xf32>
    %56 = arith.divf %54, %55 : vector<8x32xf32>
    %57 = vector.extract_strided_slice %39 {offsets = [0, 64], sizes = [8, 32], strides = [1, 1]} : vector<8x96xf32> to vector<8x32xf32>
    %58 = vector.extract_strided_slice %40 {offsets = [0, 64], sizes = [8, 32], strides = [1, 1]} : vector<8x96xf32> to vector<8x32xf32>
    %59 = vector.broadcast %7 : vector<1x32xf32> to vector<8x32xf32>
    %60 = arith.addf %58, %59 : vector<8x32xf32>
    %61 = arith.mulf %48, %60 : vector<8x32xf32>
    %62 = arith.addf %57, %61 : vector<8x32xf32>
    %63 = math.tanh %62 : vector<8x32xf32>
    %cst_17 = arith.constant 1.000000e+00 : f32
    %64 = vector.broadcast %cst_17 : f32 to vector<8x32xf32>
    %65 = arith.subf %64, %56 : vector<8x32xf32>
    %66 = arith.mulf %65, %63 : vector<8x32xf32>
    %67 = arith.mulf %56, %38 : vector<8x32xf32>
    %68 = arith.addf %66, %67 : vector<8x32xf32>
    %69 = vector.extract_strided_slice %5 {offsets = [40, 0], sizes = [8, 96], strides = [1, 1]} : vector<64x96xf32> to vector<8x96xf32>
    %cst_18 = arith.constant dense<0.000000e+00> : vector<8x96xf32>
    %70 = tpu.matmul %68, %6, %cst_18 {dimension_numbers = #tpu.dot_dimension_numbers<[1], [0], [0], [1], [0, 0, 1, 1], [], []>} : vector<8x32xf32>, vector<32x96xf32>, vector<8x96xf32> -> vector<8x96xf32>
    %71 = vector.extract_strided_slice %69 {offsets = [0, 0], sizes = [8, 32], strides = [1, 1]} : vector<8x96xf32> to vector<8x32xf32>
    %72 = vector.extract_strided_slice %70 {offsets = [0, 0], sizes = [8, 32], strides = [1, 1]} : vector<8x96xf32> to vector<8x32xf32>
    %73 = arith.addf %71, %72 : vector<8x32xf32>
    %74 = arith.negf %73 : vector<8x32xf32>
    %75 = math.exp %74 : vector<8x32xf32>
    %cst_19 = arith.constant 1.000000e+00 : f32
    %76 = vector.broadcast %cst_19 : f32 to vector<8x32xf32>
    %77 = arith.addf %76, %75 : vector<8x32xf32>
    %78 = arith.divf %76, %77 : vector<8x32xf32>
    %79 = vector.extract_strided_slice %69 {offsets = [0, 32], sizes = [8, 32], strides = [1, 1]} : vector<8x96xf32> to vector<8x32xf32>
    %80 = vector.extract_strided_slice %70 {offsets = [0, 32], sizes = [8, 32], strides = [1, 1]} : vector<8x96xf32> to vector<8x32xf32>
    %81 = arith.addf %79, %80 : vector<8x32xf32>
    %82 = arith.negf %81 : vector<8x32xf32>
    %83 = math.exp %82 : vector<8x32xf32>
    %cst_20 = arith.constant 1.000000e+00 : f32
    %84 = vector.broadcast %cst_20 : f32 to vector<8x32xf32>
    %85 = arith.addf %84, %83 : vector<8x32xf32>
    %86 = arith.divf %84, %85 : vector<8x32xf32>
    %87 = vector.extract_strided_slice %69 {offsets = [0, 64], sizes = [8, 32], strides = [1, 1]} : vector<8x96xf32> to vector<8x32xf32>
    %88 = vector.extract_strided_slice %70 {offsets = [0, 64], sizes = [8, 32], strides = [1, 1]} : vector<8x96xf32> to vector<8x32xf32>
    %89 = vector.broadcast %7 : vector<1x32xf32> to vector<8x32xf32>
    %90 = arith.addf %88, %89 : vector<8x32xf32>
    %91 = arith.mulf %78, %90 : vector<8x32xf32>
    %92 = arith.addf %87, %91 : vector<8x32xf32>
    %93 = math.tanh %92 : vector<8x32xf32>
    %cst_21 = arith.constant 1.000000e+00 : f32
    %94 = vector.broadcast %cst_21 : f32 to vector<8x32xf32>
    %95 = arith.subf %94, %86 : vector<8x32xf32>
    %96 = arith.mulf %95, %93 : vector<8x32xf32>
    %97 = arith.mulf %86, %68 : vector<8x32xf32>
    %98 = arith.addf %96, %97 : vector<8x32xf32>
    %99 = vector.extract_strided_slice %5 {offsets = [32, 0], sizes = [8, 96], strides = [1, 1]} : vector<64x96xf32> to vector<8x96xf32>
    %cst_22 = arith.constant dense<0.000000e+00> : vector<8x96xf32>
    %100 = tpu.matmul %98, %6, %cst_22 {dimension_numbers = #tpu.dot_dimension_numbers<[1], [0], [0], [1], [0, 0, 1, 1], [], []>} : vector<8x32xf32>, vector<32x96xf32>, vector<8x96xf32> -> vector<8x96xf32>
    %101 = vector.extract_strided_slice %99 {offsets = [0, 0], sizes = [8, 32], strides = [1, 1]} : vector<8x96xf32> to vector<8x32xf32>
    %102 = vector.extract_strided_slice %100 {offsets = [0, 0], sizes = [8, 32], strides = [1, 1]} : vector<8x96xf32> to vector<8x32xf32>
    %103 = arith.addf %101, %102 : vector<8x32xf32>
    %104 = arith.negf %103 : vector<8x32xf32>
    %105 = math.exp %104 : vector<8x32xf32>
    %cst_23 = arith.constant 1.000000e+00 : f32
    %106 = vector.broadcast %cst_23 : f32 to vector<8x32xf32>
    %107 = arith.addf %106, %105 : vector<8x32xf32>
    %108 = arith.divf %106, %107 : vector<8x32xf32>
    %109 = vector.extract_strided_slice %99 {offsets = [0, 32], sizes = [8, 32], strides = [1, 1]} : vector<8x96xf32> to vector<8x32xf32>
    %110 = vector.extract_strided_slice %100 {offsets = [0, 32], sizes = [8, 32], strides = [1, 1]} : vector<8x96xf32> to vector<8x32xf32>
    %111 = arith.addf %109, %110 : vector<8x32xf32>
    %112 = arith.negf %111 : vector<8x32xf32>
    %113 = math.exp %112 : vector<8x32xf32>
    %cst_24 = arith.constant 1.000000e+00 : f32
    %114 = vector.broadcast %cst_24 : f32 to vector<8x32xf32>
    %115 = arith.addf %114, %113 : vector<8x32xf32>
    %116 = arith.divf %114, %115 : vector<8x32xf32>
    %117 = vector.extract_strided_slice %99 {offsets = [0, 64], sizes = [8, 32], strides = [1, 1]} : vector<8x96xf32> to vector<8x32xf32>
    %118 = vector.extract_strided_slice %100 {offsets = [0, 64], sizes = [8, 32], strides = [1, 1]} : vector<8x96xf32> to vector<8x32xf32>
    %119 = vector.broadcast %7 : vector<1x32xf32> to vector<8x32xf32>
    %120 = arith.addf %118, %119 : vector<8x32xf32>
    %121 = arith.mulf %108, %120 : vector<8x32xf32>
    %122 = arith.addf %117, %121 : vector<8x32xf32>
    %123 = math.tanh %122 : vector<8x32xf32>
    %cst_25 = arith.constant 1.000000e+00 : f32
    %124 = vector.broadcast %cst_25 : f32 to vector<8x32xf32>
    %125 = arith.subf %124, %116 : vector<8x32xf32>
    %126 = arith.mulf %125, %123 : vector<8x32xf32>
    %127 = arith.mulf %116, %98 : vector<8x32xf32>
    %128 = arith.addf %126, %127 : vector<8x32xf32>
    %129 = vector.extract_strided_slice %5 {offsets = [24, 0], sizes = [8, 96], strides = [1, 1]} : vector<64x96xf32> to vector<8x96xf32>
    %cst_26 = arith.constant dense<0.000000e+00> : vector<8x96xf32>
    %130 = tpu.matmul %128, %6, %cst_26 {dimension_numbers = #tpu.dot_dimension_numbers<[1], [0], [0], [1], [0, 0, 1, 1], [], []>} : vector<8x32xf32>, vector<32x96xf32>, vector<8x96xf32> -> vector<8x96xf32>
    %131 = vector.extract_strided_slice %129 {offsets = [0, 0], sizes = [8, 32], strides = [1, 1]} : vector<8x96xf32> to vector<8x32xf32>
    %132 = vector.extract_strided_slice %130 {offsets = [0, 0], sizes = [8, 32], strides = [1, 1]} : vector<8x96xf32> to vector<8x32xf32>
    %133 = arith.addf %131, %132 : vector<8x32xf32>
    %134 = arith.negf %133 : vector<8x32xf32>
    %135 = math.exp %134 : vector<8x32xf32>
    %cst_27 = arith.constant 1.000000e+00 : f32
    %136 = vector.broadcast %cst_27 : f32 to vector<8x32xf32>
    %137 = arith.addf %136, %135 : vector<8x32xf32>
    %138 = arith.divf %136, %137 : vector<8x32xf32>
    %139 = vector.extract_strided_slice %129 {offsets = [0, 32], sizes = [8, 32], strides = [1, 1]} : vector<8x96xf32> to vector<8x32xf32>
    %140 = vector.extract_strided_slice %130 {offsets = [0, 32], sizes = [8, 32], strides = [1, 1]} : vector<8x96xf32> to vector<8x32xf32>
    %141 = arith.addf %139, %140 : vector<8x32xf32>
    %142 = arith.negf %141 : vector<8x32xf32>
    %143 = math.exp %142 : vector<8x32xf32>
    %cst_28 = arith.constant 1.000000e+00 : f32
    %144 = vector.broadcast %cst_28 : f32 to vector<8x32xf32>
    %145 = arith.addf %144, %143 : vector<8x32xf32>
    %146 = arith.divf %144, %145 : vector<8x32xf32>
    %147 = vector.extract_strided_slice %129 {offsets = [0, 64], sizes = [8, 32], strides = [1, 1]} : vector<8x96xf32> to vector<8x32xf32>
    %148 = vector.extract_strided_slice %130 {offsets = [0, 64], sizes = [8, 32], strides = [1, 1]} : vector<8x96xf32> to vector<8x32xf32>
    %149 = vector.broadcast %7 : vector<1x32xf32> to vector<8x32xf32>
    %150 = arith.addf %148, %149 : vector<8x32xf32>
    %151 = arith.mulf %138, %150 : vector<8x32xf32>
    %152 = arith.addf %147, %151 : vector<8x32xf32>
    %153 = math.tanh %152 : vector<8x32xf32>
    %cst_29 = arith.constant 1.000000e+00 : f32
    %154 = vector.broadcast %cst_29 : f32 to vector<8x32xf32>
    %155 = arith.subf %154, %146 : vector<8x32xf32>
    %156 = arith.mulf %155, %153 : vector<8x32xf32>
    %157 = arith.mulf %146, %128 : vector<8x32xf32>
    %158 = arith.addf %156, %157 : vector<8x32xf32>
    %159 = vector.extract_strided_slice %5 {offsets = [16, 0], sizes = [8, 96], strides = [1, 1]} : vector<64x96xf32> to vector<8x96xf32>
    %cst_30 = arith.constant dense<0.000000e+00> : vector<8x96xf32>
    %160 = tpu.matmul %158, %6, %cst_30 {dimension_numbers = #tpu.dot_dimension_numbers<[1], [0], [0], [1], [0, 0, 1, 1], [], []>} : vector<8x32xf32>, vector<32x96xf32>, vector<8x96xf32> -> vector<8x96xf32>
    %161 = vector.extract_strided_slice %159 {offsets = [0, 0], sizes = [8, 32], strides = [1, 1]} : vector<8x96xf32> to vector<8x32xf32>
    %162 = vector.extract_strided_slice %160 {offsets = [0, 0], sizes = [8, 32], strides = [1, 1]} : vector<8x96xf32> to vector<8x32xf32>
    %163 = arith.addf %161, %162 : vector<8x32xf32>
    %164 = arith.negf %163 : vector<8x32xf32>
    %165 = math.exp %164 : vector<8x32xf32>
    %cst_31 = arith.constant 1.000000e+00 : f32
    %166 = vector.broadcast %cst_31 : f32 to vector<8x32xf32>
    %167 = arith.addf %166, %165 : vector<8x32xf32>
    %168 = arith.divf %166, %167 : vector<8x32xf32>
    %169 = vector.extract_strided_slice %159 {offsets = [0, 32], sizes = [8, 32], strides = [1, 1]} : vector<8x96xf32> to vector<8x32xf32>
    %170 = vector.extract_strided_slice %160 {offsets = [0, 32], sizes = [8, 32], strides = [1, 1]} : vector<8x96xf32> to vector<8x32xf32>
    %171 = arith.addf %169, %170 : vector<8x32xf32>
    %172 = arith.negf %171 : vector<8x32xf32>
    %173 = math.exp %172 : vector<8x32xf32>
    %cst_32 = arith.constant 1.000000e+00 : f32
    %174 = vector.broadcast %cst_32 : f32 to vector<8x32xf32>
    %175 = arith.addf %174, %173 : vector<8x32xf32>
    %176 = arith.divf %174, %175 : vector<8x32xf32>
    %177 = vector.extract_strided_slice %159 {offsets = [0, 64], sizes = [8, 32], strides = [1, 1]} : vector<8x96xf32> to vector<8x32xf32>
    %178 = vector.extract_strided_slice %160 {offsets = [0, 64], sizes = [8, 32], strides = [1, 1]} : vector<8x96xf32> to vector<8x32xf32>
    %179 = vector.broadcast %7 : vector<1x32xf32> to vector<8x32xf32>
    %180 = arith.addf %178, %179 : vector<8x32xf32>
    %181 = arith.mulf %168, %180 : vector<8x32xf32>
    %182 = arith.addf %177, %181 : vector<8x32xf32>
    %183 = math.tanh %182 : vector<8x32xf32>
    %cst_33 = arith.constant 1.000000e+00 : f32
    %184 = vector.broadcast %cst_33 : f32 to vector<8x32xf32>
    %185 = arith.subf %184, %176 : vector<8x32xf32>
    %186 = arith.mulf %185, %183 : vector<8x32xf32>
    %187 = arith.mulf %176, %158 : vector<8x32xf32>
    %188 = arith.addf %186, %187 : vector<8x32xf32>
    %189 = vector.extract_strided_slice %5 {offsets = [8, 0], sizes = [8, 96], strides = [1, 1]} : vector<64x96xf32> to vector<8x96xf32>
    %cst_34 = arith.constant dense<0.000000e+00> : vector<8x96xf32>
    %190 = tpu.matmul %188, %6, %cst_34 {dimension_numbers = #tpu.dot_dimension_numbers<[1], [0], [0], [1], [0, 0, 1, 1], [], []>} : vector<8x32xf32>, vector<32x96xf32>, vector<8x96xf32> -> vector<8x96xf32>
    %191 = vector.extract_strided_slice %189 {offsets = [0, 0], sizes = [8, 32], strides = [1, 1]} : vector<8x96xf32> to vector<8x32xf32>
    %192 = vector.extract_strided_slice %190 {offsets = [0, 0], sizes = [8, 32], strides = [1, 1]} : vector<8x96xf32> to vector<8x32xf32>
    %193 = arith.addf %191, %192 : vector<8x32xf32>
    %194 = arith.negf %193 : vector<8x32xf32>
    %195 = math.exp %194 : vector<8x32xf32>
    %cst_35 = arith.constant 1.000000e+00 : f32
    %196 = vector.broadcast %cst_35 : f32 to vector<8x32xf32>
    %197 = arith.addf %196, %195 : vector<8x32xf32>
    %198 = arith.divf %196, %197 : vector<8x32xf32>
    %199 = vector.extract_strided_slice %189 {offsets = [0, 32], sizes = [8, 32], strides = [1, 1]} : vector<8x96xf32> to vector<8x32xf32>
    %200 = vector.extract_strided_slice %190 {offsets = [0, 32], sizes = [8, 32], strides = [1, 1]} : vector<8x96xf32> to vector<8x32xf32>
    %201 = arith.addf %199, %200 : vector<8x32xf32>
    %202 = arith.negf %201 : vector<8x32xf32>
    %203 = math.exp %202 : vector<8x32xf32>
    %cst_36 = arith.constant 1.000000e+00 : f32
    %204 = vector.broadcast %cst_36 : f32 to vector<8x32xf32>
    %205 = arith.addf %204, %203 : vector<8x32xf32>
    %206 = arith.divf %204, %205 : vector<8x32xf32>
    %207 = vector.extract_strided_slice %189 {offsets = [0, 64], sizes = [8, 32], strides = [1, 1]} : vector<8x96xf32> to vector<8x32xf32>
    %208 = vector.extract_strided_slice %190 {offsets = [0, 64], sizes = [8, 32], strides = [1, 1]} : vector<8x96xf32> to vector<8x32xf32>
    %209 = vector.broadcast %7 : vector<1x32xf32> to vector<8x32xf32>
    %210 = arith.addf %208, %209 : vector<8x32xf32>
    %211 = arith.mulf %198, %210 : vector<8x32xf32>
    %212 = arith.addf %207, %211 : vector<8x32xf32>
    %213 = math.tanh %212 : vector<8x32xf32>
    %cst_37 = arith.constant 1.000000e+00 : f32
    %214 = vector.broadcast %cst_37 : f32 to vector<8x32xf32>
    %215 = arith.subf %214, %206 : vector<8x32xf32>
    %216 = arith.mulf %215, %213 : vector<8x32xf32>
    %217 = arith.mulf %206, %188 : vector<8x32xf32>
    %218 = arith.addf %216, %217 : vector<8x32xf32>
    %219 = vector.extract_strided_slice %5 {offsets = [0, 0], sizes = [8, 96], strides = [1, 1]} : vector<64x96xf32> to vector<8x96xf32>
    %cst_38 = arith.constant dense<0.000000e+00> : vector<8x96xf32>
    %220 = tpu.matmul %218, %6, %cst_38 {dimension_numbers = #tpu.dot_dimension_numbers<[1], [0], [0], [1], [0, 0, 1, 1], [], []>} : vector<8x32xf32>, vector<32x96xf32>, vector<8x96xf32> -> vector<8x96xf32>
    %221 = vector.extract_strided_slice %219 {offsets = [0, 0], sizes = [8, 32], strides = [1, 1]} : vector<8x96xf32> to vector<8x32xf32>
    %222 = vector.extract_strided_slice %220 {offsets = [0, 0], sizes = [8, 32], strides = [1, 1]} : vector<8x96xf32> to vector<8x32xf32>
    %223 = arith.addf %221, %222 : vector<8x32xf32>
    %224 = arith.negf %223 : vector<8x32xf32>
    %225 = math.exp %224 : vector<8x32xf32>
    %cst_39 = arith.constant 1.000000e+00 : f32
    %226 = vector.broadcast %cst_39 : f32 to vector<8x32xf32>
    %227 = arith.addf %226, %225 : vector<8x32xf32>
    %228 = arith.divf %226, %227 : vector<8x32xf32>
    %229 = vector.extract_strided_slice %219 {offsets = [0, 32], sizes = [8, 32], strides = [1, 1]} : vector<8x96xf32> to vector<8x32xf32>
    %230 = vector.extract_strided_slice %220 {offsets = [0, 32], sizes = [8, 32], strides = [1, 1]} : vector<8x96xf32> to vector<8x32xf32>
    %231 = arith.addf %229, %230 : vector<8x32xf32>
    %232 = arith.negf %231 : vector<8x32xf32>
    %233 = math.exp %232 : vector<8x32xf32>
    %cst_40 = arith.constant 1.000000e+00 : f32
    %234 = vector.broadcast %cst_40 : f32 to vector<8x32xf32>
    %235 = arith.addf %234, %233 : vector<8x32xf32>
    %236 = arith.divf %234, %235 : vector<8x32xf32>
    %237 = vector.extract_strided_slice %219 {offsets = [0, 64], sizes = [8, 32], strides = [1, 1]} : vector<8x96xf32> to vector<8x32xf32>
    %238 = vector.extract_strided_slice %220 {offsets = [0, 64], sizes = [8, 32], strides = [1, 1]} : vector<8x96xf32> to vector<8x32xf32>
    %239 = vector.broadcast %7 : vector<1x32xf32> to vector<8x32xf32>
    %240 = arith.addf %238, %239 : vector<8x32xf32>
    %241 = arith.mulf %228, %240 : vector<8x32xf32>
    %242 = arith.addf %237, %241 : vector<8x32xf32>
    %243 = math.tanh %242 : vector<8x32xf32>
    %cst_41 = arith.constant 1.000000e+00 : f32
    %244 = vector.broadcast %cst_41 : f32 to vector<8x32xf32>
    %245 = arith.subf %244, %236 : vector<8x32xf32>
    %246 = arith.mulf %245, %243 : vector<8x32xf32>
    %247 = arith.mulf %236, %218 : vector<8x32xf32>
    %248 = arith.addf %246, %247 : vector<8x32xf32>
    %c0_42 = arith.constant 0 : index
    %c0_43 = arith.constant 0 : index
    %249 = vector.load %arg5[%c0_42, %c0_43] : memref<32x12xf32, #tpu.memory_space<vmem>>, vector<32x12xf32>
    %cst_44 = arith.constant dense<0.000000e+00> : vector<8x12xf32>
    %250 = tpu.matmul %248, %249, %cst_44 {dimension_numbers = #tpu.dot_dimension_numbers<[1], [0], [0], [1], [0, 0, 1, 1], [], []>} : vector<8x32xf32>, vector<32x12xf32>, vector<8x12xf32> -> vector<8x12xf32>
    %c0_45 = arith.constant 0 : index
    %c0_46 = arith.constant 0 : index
    %251 = vector.load %arg6[%c0_45, %c0_46] : memref<1x12xf32, #tpu.memory_space<vmem>>, vector<1x12xf32>
    %252 = vector.broadcast %251 : vector<1x12xf32> to vector<8x12xf32>
    %253 = arith.addf %250, %252 : vector<8x12xf32>
    %c0_47 = arith.constant 0 : index
    %c0_48 = arith.constant 0 : index
    %254 = vector.load %arg7[%c0_47, %c0_48] : memref<8x12xf32, #tpu.memory_space<vmem>>, vector<8x12xf32>
    tpu.vector_store %arg7[%c0_47, %c0_48], %253 {strides = array<i32>} : memref<8x12xf32, #tpu.memory_space<vmem>>, vector<8x12xf32>,
    return
  }
}

</mosaic_0001>

<llo_original>
// kernel: rnn_encoder_forward.1
$region0: #{rnn_encoder_forward.1}
  #allocation0 [shape = 'u32[]', space=smem, size = 0x4, offset = 0x4, fixed_abs, tag = 'smem constant byte address 0x4 - core index']
  #allocation1 [shape = 'u32[144,128]{1,0:T(1,128)}', space=vmem, size = 0x12000, scoped, tag = 'internal scratch']
  %s0 = inlined_call_operand.vmem [shape: f32[64,9], index: 0, kind: input, shape index: {}]
  %s1 = inlined_call_operand.vmem [shape: f32[9,96], index: 1, kind: input, shape index: {}]
  %s2 = inlined_call_operand.vmem [shape: f32[1,96], index: 2, kind: input, shape index: {}]
  %s3 = inlined_call_operand.vmem [shape: f32[32,96], index: 3, kind: input, shape index: {}]
  %s4 = inlined_call_operand.vmem [shape: f32[1,32], index: 4, kind: input, shape index: {}]
  %s5 = inlined_call_operand.vmem [shape: f32[32,12], index: 5, kind: input, shape index: {}]
  %s6 = inlined_call_operand.vmem [shape: f32[1,12], index: 6, kind: input, shape index: {}]
  %s7 = inlined_call_operand.vmem [shape: f32[8,12], index: 7, kind: output, shape index: {}]
  %s8 = sld [smem:[#allocation0]]
  $region38: #{rnn_encoder_forward.1} parent=0
    _
  %s10 = ssub.s32 1, %s8
  %s11 = scalar_select 0, %s10, %s8
  // Predicated region
  $region2: #{rnn_encoder_forward.1} parent=0 // pred_check
    _
  $region3: #{rnn_encoder_forward.1} parent=0 // pred_check_branch
    %13 = sbr.rel (0) target = $region5
  $region4: #{rnn_encoder_forward.1} parent=0 // pred_region
    _
  $region5: #{rnn_encoder_forward.1} parent=0 // pred_fallthru
    _
  // Predicated region
  $region6: #{rnn_encoder_forward.1} parent=0 // pred_check
    _
  $region7: #{rnn_encoder_forward.1} parent=0 // pred_check_branch
    %15 = sbr.rel (0) target = $region9
  $region8: #{rnn_encoder_forward.1} parent=0 // pred_region
    _
  $region9: #{rnn_encoder_forward.1} parent=0 // pred_fallthru
    _
  // Predicated region
  $region10: #{rnn_encoder_forward.1} parent=0 // pred_check
    _
  $region11: #{rnn_encoder_forward.1} parent=0 // pred_check_branch
    %17 = sbr.rel (0) target = $region13
  $region12: #{rnn_encoder_forward.1} parent=0 // pred_region
    _
  $region13: #{rnn_encoder_forward.1} parent=0 // pred_fallthru
    _
  // Predicated region
  $region14: #{rnn_encoder_forward.1} parent=0 // pred_check
    _
  $region15: #{rnn_encoder_forward.1} parent=0 // pred_check_branch
    %19 = sbr.rel (0) target = $region17
  $region16: #{rnn_encoder_forward.1} parent=0 // pred_region
    _
  $region17: #{rnn_encoder_forward.1} parent=0 // pred_fallthru
    _
  // Predicated region
  $region18: #{rnn_encoder_forward.1} parent=0 // pred_check
    _
  $region19: #{rnn_encoder_forward.1} parent=0 // pred_check_branch
    %21 = sbr.rel (0) target = $region21
  $region20: #{rnn_encoder_forward.1} parent=0 // pred_region
    _
  $region21: #{rnn_encoder_forward.1} parent=0 // pred_fallthru
    _
  // Predicated region
  $region22: #{rnn_encoder_forward.1} parent=0 // pred_check
    _
  $region23: #{rnn_encoder_forward.1} parent=0 // pred_check_branch
    %23 = sbr.rel (0) target = $region25
  $region24: #{rnn_encoder_forward.1} parent=0 // pred_region
    _
  $region25: #{rnn_encoder_forward.1} parent=0 // pred_fallthru
    _
  // Predicated region
  $region26: #{rnn_encoder_forward.1} parent=0 // pred_check
    _
  $region27: #{rnn_encoder_forward.1} parent=0 // pred_check_branch
    %25 = sbr.rel (0) target = $region29
  $region28: #{rnn_encoder_forward.1} parent=0 // pred_region
    _
  $region29: #{rnn_encoder_forward.1} parent=0 // pred_fallthru
    _
  %v26 = vld [vmem:[%s0] sm:$0xff]
  %v27 = vld [vmem:[%s0 + $0x8] sm:$0xff]
  %v28 = vld [vmem:[%s0 + $0x10] sm:$0xff]
  %v29 = vld [vmem:[%s0 + $0x18] sm:$0xff]
  %v30 = vld [vmem:[%s0 + $0x20] sm:$0xff]
  %v31 = vld [vmem:[%s0 + $0x28] sm:$0xff]
  %v32 = vld [vmem:[%s0 + $0x30] sm:$0xff]
  %v33 = vld [vmem:[%s0 + $0x38] sm:$0xff]
  %v34 = vld [vmem:[%s1] sm:$0xff]
  %v35 = vld [vmem:[%s1 + $0x8] sm:$0x1]
  %v36 = vld [vmem:[%s2] sm:$0x1]
  %v38 = vlaneseq
  %v39 = vshrl.u32 %v38, 7
  %v40 = vsub.s32 0, %v39
  %v41 = vrot.slane %v36, %v40
  %vm43 = vcmask 72704
  %v45 = vsel %vm43, %v26, 0
  %v48 = vsel %vm43, %v27, 0
  %v51 = vsel %vm43, %v28, 0
  %v54 = vsel %vm43, %v29, 0
  %v57 = vsel %vm43, %v30, 0
  %v60 = vsel %vm43, %v31, 0
  %v63 = vsel %vm43, %v32, 0
  %v66 = vsel %vm43, %v33, 0
  %vm68 = vcmask 1040384
  %v70 = vsel %vm68, %v35, 0
  %72 = vmatprep.subr.mxu0 0.0
  %73 = vmatpush1.msra.mxu0 %v34
  %74 = vmatprep.subr.mxu0 0.0
  %75 = vmatpush1.msra.mxu0 %v70
  %76 = vmatprep.subr.mxu0 0.0
  %77 = vmatpush1.msra.mxu0 0.0
  %78 = vmatprep.subr.mxu0 0.0
  %79 = vmatpush1.msra.mxu0 0.0
  %80 = vmatprep.subr.mxu0 0.0
  %81 = vmatpush1.msra.mxu0 0.0
  %82 = vmatprep.subr.mxu0 0.0
  %83 = vmatpush1.msra.mxu0 0.0
  %84 = vmatprep.subr.mxu0 0.0
  %85 = vmatpush1.msra.mxu0 0.0
  %86 = vmatprep.subr.mxu0 0.0
  %87 = vmatpush1.msra.mxu0 0.0
  %88 = vmatprep.subr.mxu0 0.0
  %89 = vmatpush1.msra.mxu0 0.0
  %90 = vmatprep.subr.mxu0 0.0
  %91 = vmatpush1.msra.mxu0 0.0
  %92 = vmatprep.subr.mxu0 0.0
  %93 = vmatpush1.msra.mxu0 0.0
  %94 = vmatprep.subr.mxu0 0.0
  %95 = vmatpush1.msra.mxu0 0.0
  %96 = vmatprep.subr.mxu0 0.0
  %97 = vmatpush1.msra.mxu0 0.0
  %98 = vmatprep.subr.mxu0 0.0
  %99 = vmatpush1.msra.mxu0 0.0
  %100 = vmatprep.subr.mxu0 0.0
  %101 = vmatpush1.msra.mxu0 0.0
  %102 = vmatprep.subr.mxu0 0.0
  %103 = vmatpush1.msra.mxu0 0.0
  %104 = vmatprep.subr.mxu0 0.0
  %105 = vmatpush1.msra.mxu0 0.0
  %106 = vmatprep.subr.mxu0 0.0
  %107 = vmatpush1.msra.mxu0 0.0
  %108 = vmatprep.subr.mxu0 0.0
  %109 = vmatpush1.msra.mxu0 0.0
  %110 = vmatprep.subr.mxu0 0.0
  %111 = vmatpush1.msra.mxu0 0.0
  %112 = vmatprep.subr.mxu0 0.0
  %113 = vmatpush1.msra.mxu0 0.0
  %114 = vmatprep.subr.mxu0 0.0
  %115 = vmatpush1.msra.mxu0 0.0
  %116 = vmatprep.subr.mxu0 0.0
  %117 = vmatpush1.msra.mxu0 0.0
  %118 = vmatprep.subr.mxu0 0.0
  %119 = vmatpush1.msra.mxu0 0.0
  %120 = vmatprep.subr.mxu0 0.0
  %121 = vmatpush1.msra.mxu0 0.0
  %122 = vmatprep.subr.mxu0 0.0
  %123 = vmatpush1.msra.mxu0 0.0
  %124 = vmatprep.subr.mxu0 0.0
  %125 = vmatpush1.msra.mxu0 0.0
  %126 = vmatprep.subr.mxu0 0.0
  %127 = vmatpush1.msra.mxu0 0.0
  %128 = vmatprep.subr.mxu0 0.0
  %129 = vmatpush1.msra.mxu0 0.0
  %130 = vmatprep.subr.mxu0 0.0
  %131 = vmatpush1.msra.mxu0 0.0
  %132 = vmatprep.subr.mxu0 0.0
  %133 = vmatpush1.msra.mxu0 0.0
  %134 = vmatprep.subr.mxu0 0.0
  %135 = vmatpush1.msra.mxu0 0.0
  %136 = vmatprep.mubr.f32.mxu0 0.0
  %137 = vmatmul.mubr.f32.gmra.mrb[0].mxu0 %v45
  %v138 = vpop.f32.mrb[0].mxu0
  %v139 = vadd.f32 %v41, %v138
  %v140 = vpop.f32.mrb[0].mxu0
  %141 = vmatprep.mubr.f32.mxu0 0.0
  %142 = vmatmul.mubr.f32.gmra.mrb[0].mxu0 %v48
  %v143 = vpop.f32.mrb[0].mxu0
  %v144 = vadd.f32 %v41, %v143
  %v145 = vpop.f32.mrb[0].mxu0
  %146 = vmatprep.mubr.f32.mxu0 0.0
  %147 = vmatmul.mubr.f32.gmra.mrb[0].mxu0 %v51
  %v148 = vpop.f32.mrb[0].mxu0
  %v149 = vadd.f32 %v41, %v148
  %v150 = vpop.f32.mrb[0].mxu0
  %151 = vmatprep.mubr.f32.mxu0 0.0
  %152 = vmatmul.mubr.f32.gmra.mrb[0].mxu0 %v54
  %v153 = vpop.f32.mrb[0].mxu0
  %v154 = vadd.f32 %v41, %v153
  %v155 = vpop.f32.mrb[0].mxu0
  %156 = vmatprep.mubr.f32.mxu0 0.0
  %157 = vmatmul.mubr.f32.gmra.mrb[0].mxu0 %v57
  %v158 = vpop.f32.mrb[0].mxu0
  %v159 = vadd.f32 %v41, %v158
  %v160 = vpop.f32.mrb[0].mxu0
  %161 = vmatprep.mubr.f32.mxu0 0.0
  %162 = vmatmul.mubr.f32.gmra.mrb[0].mxu0 %v60
  %v163 = vpop.f32.mrb[0].mxu0
  %v164 = vadd.f32 %v41, %v163
  %v165 = vpop.f32.mrb[0].mxu0
  %166 = vmatprep.mubr.f32.mxu0 0.0
  %167 = vmatmul.mubr.f32.gmra.mrb[0].mxu0 %v63
  %v168 = vpop.f32.mrb[0].mxu0
  %v169 = vadd.f32 %v41, %v168
  %v170 = vpop.f32.mrb[0].mxu0
  %171 = vmatprep.mubr.f32.mxu0 0.0
  %172 = vmatmul.mubr.f32.gmra.mrb[0].mxu0 %v66
  %v173 = vpop.f32.mrb[0].mxu0
  %v174 = vadd.f32 %v41, %v173
  %v175 = vpop.f32.mrb[0].mxu0
  %176 = vdwg.mxu0
  %v177 = vld [vmem:[%s3] sm:$0xff]
  %v178 = vld [vmem:[%s3 + $0x8] sm:$0xff]
  %v179 = vld [vmem:[%s3 + $0x10] sm:$0xff]
  %v180 = vld [vmem:[%s3 + $0x18] sm:$0xff]
  %v181 = vld [vmem:[%s4] sm:$0x1]
  %vm182 = vcmask 261120
  %v184 = vsel %vm182, 0.0, 0
  %186 = vmatprep.subr.mxu0 0.0
  %187 = vmatpush1.msra.mxu0 %v177
  %188 = vmatprep.subr.mxu0 0.0
  %189 = vmatpush1.msra.mxu0 %v178
  %190 = vmatprep.subr.mxu0 0.0
  %191 = vmatpush1.msra.mxu0 %v179
  %192 = vmatprep.subr.mxu0 0.0
  %193 = vmatpush1.msra.mxu0 %v180
  %194 = vmatprep.subr.mxu0 0.0
  %195 = vmatpush1.msra.mxu0 0.0
  %196 = vmatprep.subr.mxu0 0.0
  %197 = vmatpush1.msra.mxu0 0.0
  %198 = vmatprep.subr.mxu0 0.0
  %199 = vmatpush1.msra.mxu0 0.0
  %200 = vmatprep.subr.mxu0 0.0
  %201 = vmatpush1.msra.mxu0 0.0
  %202 = vmatprep.subr.mxu0 0.0
  %203 = vmatpush1.msra.mxu0 0.0
  %204 = vmatprep.subr.mxu0 0.0
  %205 = vmatpush1.msra.mxu0 0.0
  %206 = vmatprep.subr.mxu0 0.0
  %207 = vmatpush1.msra.mxu0 0.0
  %208 = vmatprep.subr.mxu0 0.0
  %209 = vmatpush1.msra.mxu0 0.0
  %210 = vmatprep.subr.mxu0 0.0
  %211 = vmatpush1.msra.mxu0 0.0
  %212 = vmatprep.subr.mxu0 0.0
  %213 = vmatpush1.msra.mxu0 0.0
  %214 = vmatprep.subr.mxu0 0.0
  %215 = vmatpush1.msra.mxu0 0.0
  %216 = vmatprep.subr.mxu0 0.0
  %217 = vmatpush1.msra.mxu0 0.0
  %218 = vmatprep.subr.mxu0 0.0
  %219 = vmatpush1.msra.mxu0 0.0
  %220 = vmatprep.subr.mxu0 0.0
  %221 = vmatpush1.msra.mxu0 0.0
  %222 = vmatprep.subr.mxu0 0.0
  %223 = vmatpush1.msra.mxu0 0.0
  %224 = vmatprep.subr.mxu0 0.0
  %225 = vmatpush1.msra.mxu0 0.0
  %226 = vmatprep.subr.mxu0 0.0
  %227 = vmatpush1.msra.mxu0 0.0
  %228 = vmatprep.subr.mxu0 0.0
  %229 = vmatpush1.msra.mxu0 0.0
  %230 = vmatprep.subr.mxu0 0.0
  %231 = vmatpush1.msra.mxu0 0.0
  %232 = vmatprep.subr.mxu0 0.0
  %233 = vmatpush1.msra.mxu0 0.0
  %234 = vmatprep.subr.mxu0 0.0
  %235 = vmatpush1.msra.mxu0 0.0
  %236 = vmatprep.subr.mxu0 0.0
  %237 = vmatpush1.msra.mxu0 0.0
  %238 = vmatprep.subr.mxu0 0.0
  %239 = vmatpush1.msra.mxu0 0.0
  %240 = vmatprep.subr.mxu0 0.0
  %241 = vmatpush1.msra.mxu0 0.0
  %242 = vmatprep.subr.mxu0 0.0
  %243 = vmatpush1.msra.mxu0 0.0
  %244 = vmatprep.subr.mxu0 0.0
  %245 = vmatpush1.msra.mxu0 0.0
  %246 = vmatprep.subr.mxu0 0.0
  %247 = vmatpush1.msra.mxu0 0.0
  %248 = vmatprep.subr.mxu0 0.0
  %249 = vmatpush1.msra.mxu0 0.0
  %250 = vmatprep.mubr.f32.mxu0 0.0
  %251 = vmatmul.mubr.f32.gmra.mrb[0].mxu0 %v184
  %v252 = vpop.f32.mrb[0].mxu0
  %v253 = vadd.f32 0.0, %v252
  %v254 = vpop.f32.mrb[0].mxu0
  %255 = vdwg.mxu0
  %v256 = vadd.f32 %v174, %v253
  %v257 = vxor.u32 %v256, 2147483648
  %v258 = vmul.f32 %v257, 1.442695
  %v259 = vpow.pop %v258
  %v260 = vadd.f32 %v259, 1.0
  %v261 = vrcp.pop %v260
  %v262 = vmul.f32 1.0, %v261
  %v264 = vlaneseq
  %v265 = vshrl.u32 %v264, 7
  %v266 = vsub.s32 0, %v265
  %v267 = vrot.slane %v181, %v266
  %268 = vrot.lane.b32.xlu0 %v267, 64
  %v269 = vpop.permute.xlu0 %268
  %v271 = vadd.f32 %v253, %v269
  %273 = vrot.lane.b32.xlu0 %v271, 64
  %v274 = vpop.permute.xlu0 %273
  %v276 = vmul.f32 %v262, %v274
  %278 = vrot.lane.b32.xlu0 %v276, 64
  %v279 = vpop.permute.xlu0 %278
  %v281 = vadd.f32 %v174, %v279
  %v282 = vtanh.pop %v281
  %v283 = vsub.f32 1.0, %v262
  %285 = vrot.lane.b32.xlu0 %v282, 96
  %v286 = vpop.permute.xlu0 %285
  %v288 = vmul.f32 %v283, %v286
  %v289 = vmul.f32 %v262, 0.0
  %v290 = vadd.f32 %v288, %v289
  %292 = vrot.lane.b32.xlu0 %v290, 96
  %v293 = vpop.permute.xlu0 %292
  %v294 = vsel %vm182, %v293, 0
  %296 = vmatprep.subr.mxu0 0.0
  %297 = vmatpush1.msra.mxu0 %v177
  %298 = vmatprep.subr.mxu0 0.0
  %299 = vmatpush1.msra.mxu0 %v178
  %300 = vmatprep.subr.mxu0 0.0
  %301 = vmatpush1.msra.mxu0 %v179
  %302 = vmatprep.subr.mxu0 0.0
  %303 = vmatpush1.msra.mxu0 %v180
  %304 = vmatprep.subr.mxu0 0.0
  %305 = vmatpush1.msra.mxu0 0.0
  %306 = vmatprep.subr.mxu0 0.0
  %307 = vmatpush1.msra.mxu0 0.0
  %308 = vmatprep.subr.mxu0 0.0
  %309 = vmatpush1.msra.mxu0 0.0
  %310 = vmatprep.subr.mxu0 0.0
  %311 = vmatpush1.msra.mxu0 0.0
  %312 = vmatprep.subr.mxu0 0.0
  %313 = vmatpush1.msra.mxu0 0.0
  %314 = vmatprep.subr.mxu0 0.0
  %315 = vmatpush1.msra.mxu0 0.0
  %316 = vmatprep.subr.mxu0 0.0
  %317 = vmatpush1.msra.mxu0 0.0
  %318 = vmatprep.subr.mxu0 0.0
  %319 = vmatpush1.msra.mxu0 0.0
  %320 = vmatprep.subr.mxu0 0.0
  %321 = vmatpush1.msra.mxu0 0.0
  %322 = vmatprep.subr.mxu0 0.0
  %323 = vmatpush1.msra.mxu0 0.0
  %324 = vmatprep.subr.mxu0 0.0
  %325 = vmatpush1.msra.mxu0 0.0
  %326 = vmatprep.subr.mxu0 0.0
  %327 = vmatpush1.msra.mxu0 0.0
  %328 = vmatprep.subr.mxu0 0.0
  %329 = vmatpush1.msra.mxu0 0.0
  %330 = vmatprep.subr.mxu0 0.0
  %331 = vmatpush1.msra.mxu0 0.0
  %332 = vmatprep.subr.mxu0 0.0
  %333 = vmatpush1.msra.mxu0 0.0
  %334 = vmatprep.subr.mxu0 0.0
  %335 = vmatpush1.msra.mxu0 0.0
  %336 = vmatprep.subr.mxu0 0.0
  %337 = vmatpush1.msra.mxu0 0.0
  %338 = vmatprep.subr.mxu0 0.0
  %339 = vmatpush1.msra.mxu0 0.0
  %340 = vmatprep.subr.mxu0 0.0
  %341 = vmatpush1.msra.mxu0 0.0
  %342 = vmatprep.subr.mxu0 0.0
  %343 = vmatpush1.msra.mxu0 0.0
  %344 = vmatprep.subr.mxu0 0.0
  %345 = vmatpush1.msra.mxu0 0.0
  %346 = vmatprep.subr.mxu0 0.0
  %347 = vmatpush1.msra.mxu0 0.0
  %348 = vmatprep.subr.mxu0 0.0
  %349 = vmatpush1.msra.mxu0 0.0
  %350 = vmatprep.subr.mxu0 0.0
  %351 = vmatpush1.msra.mxu0 0.0
  %352 = vmatprep.subr.mxu0 0.0
  %353 = vmatpush1.msra.mxu0 0.0
  %354 = vmatprep.subr.mxu0 0.0
  %355 = vmatpush1.msra.mxu0 0.0
  %356 = vmatprep.subr.mxu0 0.0
  %357 = vmatpush1.msra.mxu0 0.0
  %358 = vmatprep.subr.mxu0 0.0
  %359 = vmatpush1.msra.mxu0 0.0
  %360 = vmatprep.mubr.f32.mxu0 0.0
  %361 = vmatmul.mubr.f32.gmra.mrb[0].mxu0 %v294
  %v362 = vpop.f32.mrb[0].mxu0
  %v363 = vadd.f32 0.0, %v362
  %v364 = vpop.f32.mrb[0].mxu0
  %365 = vdwg.mxu0
  %v366 = vadd.f32 %v169, %v363
  %v367 = vxor.u32 %v366, 2147483648
  %v368 = vmul.f32 %v367, 1.442695
  %v369 = vpow.pop %v368
  %v370 = vadd.f32 %v369, 1.0
  %v371 = vrcp.pop %v370
  %v372 = vmul.f32 1.0, %v371
  %v373 = vadd.f32 %v363, %v269
  %375 = vrot.lane.b32.xlu0 %v373, 64
  %v376 = vpop.permute.xlu0 %375
  %v378 = vmul.f32 %v372, %v376
  %380 = vrot.lane.b32.xlu0 %v378, 64
  %v381 = vpop.permute.xlu0 %380
  %v383 = vadd.f32 %v169, %v381
  %v384 = vtanh.pop %v383
  %v385 = vsub.f32 1.0, %v372
  %387 = vrot.lane.b32.xlu0 %v384, 96
  %v388 = vpop.permute.xlu0 %387
  %v390 = vmul.f32 %v385, %v388
  %v391 = vmul.f32 %v372, %v290
  %v392 = vadd.f32 %v390, %v391
  %394 = vrot.lane.b32.xlu0 %v392, 96
  %v395 = vpop.permute.xlu0 %394
  %v396 = vsel %vm182, %v395, 0
  %398 = vmatprep.subr.mxu0 0.0
  %399 = vmatpush1.msra.mxu0 %v177
  %400 = vmatprep.subr.mxu0 0.0
  %401 = vmatpush1.msra.mxu0 %v178
  %402 = vmatprep.subr.mxu0 0.0
  %403 = vmatpush1.msra.mxu0 %v179
  %404 = vmatprep.subr.mxu0 0.0
  %405 = vmatpush1.msra.mxu0 %v180
  %406 = vmatprep.subr.mxu0 0.0
  %407 = vmatpush1.msra.mxu0 0.0
  %408 = vmatprep.subr.mxu0 0.0
  %409 = vmatpush1.msra.mxu0 0.0
  %410 = vmatprep.subr.mxu0 0.0
  %411 = vmatpush1.msra.mxu0 0.0
  %412 = vmatprep.subr.mxu0 0.0
  %413 = vmatpush1.msra.mxu0 0.0
  %414 = vmatprep.subr.mxu0 0.0
  %415 = vmatpush1.msra.mxu0 0.0
  %416 = vmatprep.subr.mxu0 0.0
  %417 = vmatpush1.msra.mxu0 0.0
  %418 = vmatprep.subr.mxu0 0.0
  %419 = vmatpush1.msra.mxu0 0.0
  %420 = vmatprep.subr.mxu0 0.0
  %421 = vmatpush1.msra.mxu0 0.0
  %422 = vmatprep.subr.mxu0 0.0
  %423 = vmatpush1.msra.mxu0 0.0
  %424 = vmatprep.subr.mxu0 0.0
  %425 = vmatpush1.msra.mxu0 0.0
  %426 = vmatprep.subr.mxu0 0.0
  %427 = vmatpush1.msra.mxu0 0.0
  %428 = vmatprep.subr.mxu0 0.0
  %429 = vmatpush1.msra.mxu0 0.0
  %430 = vmatprep.subr.mxu0 0.0
  %431 = vmatpush1.msra.mxu0 0.0
  %432 = vmatprep.subr.mxu0 0.0
  %433 = vmatpush1.msra.mxu0 0.0
  %434 = vmatprep.subr.mxu0 0.0
  %435 = vmatpush1.msra.mxu0 0.0
  %436 = vmatprep.subr.mxu0 0.0
  %437 = vmatpush1.msra.mxu0 0.0
  %438 = vmatprep.subr.mxu0 0.0
  %439 = vmatpush1.msra.mxu0 0.0
  %440 = vmatprep.subr.mxu0 0.0
  %441 = vmatpush1.msra.mxu0 0.0
  %442 = vmatprep.subr.mxu0 0.0
  %443 = vmatpush1.msra.mxu0 0.0
  %444 = vmatprep.subr.mxu0 0.0
  %445 = vmatpush1.msra.mxu0 0.0
  %446 = vmatprep.subr.mxu0 0.0
  %447 = vmatpush1.msra.mxu0 0.0
  %448 = vmatprep.subr.mxu0 0.0
  %449 = vmatpush1.msra.mxu0 0.0
  %450 = vmatprep.subr.mxu0 0.0
  %451 = vmatpush1.msra.mxu0 0.0
  %452 = vmatprep.subr.mxu0 0.0
  %453 = vmatpush1.msra.mxu0 0.0
  %454 = vmatprep.subr.mxu0 0.0
  %455 = vmatpush1.msra.mxu0 0.0
  %456 = vmatprep.subr.mxu0 0.0
  %457 = vmatpush1.msra.mxu0 0.0
  %458 = vmatprep.subr.mxu0 0.0
  %459 = vmatpush1.msra.mxu0 0.0
  %460 = vmatprep.subr.mxu0 0.0
  %461 = vmatpush1.msra.mxu0 0.0
  %462 = vmatprep.mubr.f32.mxu0 0.0
  %463 = vmatmul.mubr.f32.gmra.mrb[0].mxu0 %v396
  %v464 = vpop.f32.mrb[0].mxu0
  %v465 = vadd.f32 0.0, %v464
  %v466 = vpop.f32.mrb[0].mxu0
  %467 = vdwg.mxu0
  %v468 = vadd.f32 %v164, %v465
  %v469 = vxor.u32 %v468, 2147483648
  %v470 = vmul.f32 %v469, 1.442695
  %v471 = vpow.pop %v470
  %v472 = vadd.f32 %v471, 1.0
  %v473 = vrcp.pop %v472
  %v474 = vmul.f32 1.0, %v473
  %v475 = vadd.f32 %v465, %v269
  %477 = vrot.lane.b32.xlu0 %v475, 64
  %v478 = vpop.permute.xlu0 %477
  %v480 = vmul.f32 %v474, %v478
  %482 = vrot.lane.b32.xlu0 %v480, 64
  %v483 = vpop.permute.xlu0 %482
  %v485 = vadd.f32 %v164, %v483
  %v486 = vtanh.pop %v485
  %v487 = vsub.f32 1.0, %v474
  %489 = vrot.lane.b32.xlu0 %v486, 96
  %v490 = vpop.permute.xlu0 %489
  %v492 = vmul.f32 %v487, %v490
  %v493 = vmul.f32 %v474, %v392
  %v494 = vadd.f32 %v492, %v493
  %496 = vrot.lane.b32.xlu0 %v494, 96
  %v497 = vpop.permute.xlu0 %496
  %v498 = vsel %vm182, %v497, 0
  %500 = vmatprep.subr.mxu0 0.0
  %501 = vmatpush1.msra.mxu0 %v177
  %502 = vmatprep.subr.mxu0 0.0
  %503 = vmatpush1.msra.mxu0 %v178
  %504 = vmatprep.subr.mxu0 0.0
  %505 = vmatpush1.msra.mxu0 %v179
  %506 = vmatprep.subr.mxu0 0.0
  %507 = vmatpush1.msra.mxu0 %v180
  %508 = vmatprep.subr.mxu0 0.0
  %509 = vmatpush1.msra.mxu0 0.0
  %510 = vmatprep.subr.mxu0 0.0
  %511 = vmatpush1.msra.mxu0 0.0
  %512 = vmatprep.subr.mxu0 0.0
  %513 = vmatpush1.msra.mxu0 0.0
  %514 = vmatprep.subr.mxu0 0.0
  %515 = vmatpush1.msra.mxu0 0.0
  %516 = vmatprep.subr.mxu0 0.0
  %517 = vmatpush1.msra.mxu0 0.0
  %518 = vmatprep.subr.mxu0 0.0
  %519 = vmatpush1.msra.mxu0 0.0
  %520 = vmatprep.subr.mxu0 0.0
  %521 = vmatpush1.msra.mxu0 0.0
  %522 = vmatprep.subr.mxu0 0.0
  %523 = vmatpush1.msra.mxu0 0.0
  %524 = vmatprep.subr.mxu0 0.0
  %525 = vmatpush1.msra.mxu0 0.0
  %526 = vmatprep.subr.mxu0 0.0
  %527 = vmatpush1.msra.mxu0 0.0
  %528 = vmatprep.subr.mxu0 0.0
  %529 = vmatpush1.msra.mxu0 0.0
  %530 = vmatprep.subr.mxu0 0.0
  %531 = vmatpush1.msra.mxu0 0.0
  %532 = vmatprep.subr.mxu0 0.0
  %533 = vmatpush1.msra.mxu0 0.0
  %534 = vmatprep.subr.mxu0 0.0
  %535 = vmatpush1.msra.mxu0 0.0
  %536 = vmatprep.subr.mxu0 0.0
  %537 = vmatpush1.msra.mxu0 0.0
  %538 = vmatprep.subr.mxu0 0.0
  %539 = vmatpush1.msra.mxu0 0.0
  %540 = vmatprep.subr.mxu0 0.0
  %541 = vmatpush1.msra.mxu0 0.0
  %542 = vmatprep.subr.mxu0 0.0
  %543 = vmatpush1.msra.mxu0 0.0
  %544 = vmatprep.subr.mxu0 0.0
  %545 = vmatpush1.msra.mxu0 0.0
  %546 = vmatprep.subr.mxu0 0.0
  %547 = vmatpush1.msra.mxu0 0.0
  %548 = vmatprep.subr.mxu0 0.0
  %549 = vmatpush1.msra.mxu0 0.0
  %550 = vmatprep.subr.mxu0 0.0
  %551 = vmatpush1.msra.mxu0 0.0
  %552 = vmatprep.subr.mxu0 0.0
  %553 = vmatpush1.msra.mxu0 0.0
  %554 = vmatprep.subr.mxu0 0.0
  %555 = vmatpush1.msra.mxu0 0.0
  %556 = vmatprep.subr.mxu0 0.0
  %557 = vmatpush1.msra.mxu0 0.0
  %558 = vmatprep.subr.mxu0 0.0
  %559 = vmatpush1.msra.mxu0 0.0
  %560 = vmatprep.subr.mxu0 0.0
  %561 = vmatpush1.msra.mxu0 0.0
  %562 = vmatprep.subr.mxu0 0.0
  %563 = vmatpush1.msra.mxu0 0.0
  %564 = vmatprep.mubr.f32.mxu0 0.0
  %565 = vmatmul.mubr.f32.gmra.mrb[0].mxu0 %v498
  %v566 = vpop.f32.mrb[0].mxu0
  %v567 = vadd.f32 0.0, %v566
  %v568 = vpop.f32.mrb[0].mxu0
  %569 = vdwg.mxu0
  %v570 = vadd.f32 %v159, %v567
  %v571 = vxor.u32 %v570, 2147483648
  %v572 = vmul.f32 %v571, 1.442695
  %v573 = vpow.pop %v572
  %v574 = vadd.f32 %v573, 1.0
  %v575 = vrcp.pop %v574
  %v576 = vmul.f32 1.0, %v575
  %v577 = vadd.f32 %v567, %v269
  %579 = vrot.lane.b32.xlu0 %v577, 64
  %v580 = vpop.permute.xlu0 %579
  %v582 = vmul.f32 %v576, %v580
  %584 = vrot.lane.b32.xlu0 %v582, 64
  %v585 = vpop.permute.xlu0 %584
  %v587 = vadd.f32 %v159, %v585
  %v588 = vtanh.pop %v587
  %v589 = vsub.f32 1.0, %v576
  %591 = vrot.lane.b32.xlu0 %v588, 96
  %v592 = vpop.permute.xlu0 %591
  %v594 = vmul.f32 %v589, %v592
  %v595 = vmul.f32 %v576, %v494
  %v596 = vadd.f32 %v594, %v595
  %598 = vrot.lane.b32.xlu0 %v596, 96
  %v599 = vpop.permute.xlu0 %598
  %v600 = vsel %vm182, %v599, 0
  %602 = vmatprep.subr.mxu0 0.0
  %603 = vmatpush1.msra.mxu0 %v177
  %604 = vmatprep.subr.mxu0 0.0
  %605 = vmatpush1.msra.mxu0 %v178
  %606 = vmatprep.subr.mxu0 0.0
  %607 = vmatpush1.msra.mxu0 %v179
  %608 = vmatprep.subr.mxu0 0.0
  %609 = vmatpush1.msra.mxu0 %v180
  %610 = vmatprep.subr.mxu0 0.0
  %611 = vmatpush1.msra.mxu0 0.0
  %612 = vmatprep.subr.mxu0 0.0
  %613 = vmatpush1.msra.mxu0 0.0
  %614 = vmatprep.subr.mxu0 0.0
  %615 = vmatpush1.msra.mxu0 0.0
  %616 = vmatprep.subr.mxu0 0.0
  %617 = vmatpush1.msra.mxu0 0.0
  %618 = vmatprep.subr.mxu0 0.0
  %619 = vmatpush1.msra.mxu0 0.0
  %620 = vmatprep.subr.mxu0 0.0
  %621 = vmatpush1.msra.mxu0 0.0
  %622 = vmatprep.subr.mxu0 0.0
  %623 = vmatpush1.msra.mxu0 0.0
  %624 = vmatprep.subr.mxu0 0.0
  %625 = vmatpush1.msra.mxu0 0.0
  %626 = vmatprep.subr.mxu0 0.0
  %627 = vmatpush1.msra.mxu0 0.0
  %628 = vmatprep.subr.mxu0 0.0
  %629 = vmatpush1.msra.mxu0 0.0
  %630 = vmatprep.subr.mxu0 0.0
  %631 = vmatpush1.msra.mxu0 0.0
  %632 = vmatprep.subr.mxu0 0.0
  %633 = vmatpush1.msra.mxu0 0.0
  %634 = vmatprep.subr.mxu0 0.0
  %635 = vmatpush1.msra.mxu0 0.0
  %636 = vmatprep.subr.mxu0 0.0
  %637 = vmatpush1.msra.mxu0 0.0
  %638 = vmatprep.subr.mxu0 0.0
  %639 = vmatpush1.msra.mxu0 0.0
  %640 = vmatprep.subr.mxu0 0.0
  %641 = vmatpush1.msra.mxu0 0.0
  %642 = vmatprep.subr.mxu0 0.0
  %643 = vmatpush1.msra.mxu0 0.0
  %644 = vmatprep.subr.mxu0 0.0
  %645 = vmatpush1.msra.mxu0 0.0
  %646 = vmatprep.subr.mxu0 0.0
  %647 = vmatpush1.msra.mxu0 0.0
  %648 = vmatprep.subr.mxu0 0.0
  %649 = vmatpush1.msra.mxu0 0.0
  %650 = vmatprep.subr.mxu0 0.0
  %651 = vmatpush1.msra.mxu0 0.0
  %652 = vmatprep.subr.mxu0 0.0
  %653 = vmatpush1.msra.mxu0 0.0
  %654 = vmatprep.subr.mxu0 0.0
  %655 = vmatpush1.msra.mxu0 0.0
  %656 = vmatprep.subr.mxu0 0.0
  %657 = vmatpush1.msra.mxu0 0.0
  %658 = vmatprep.subr.mxu0 0.0
  %659 = vmatpush1.msra.mxu0 0.0
  %660 = vmatprep.subr.mxu0 0.0
  %661 = vmatpush1.msra.mxu0 0.0
  %662 = vmatprep.subr.mxu0 0.0
  %663 = vmatpush1.msra.mxu0 0.0
  %664 = vmatprep.subr.mxu0 0.0
  %665 = vmatpush1.msra.mxu0 0.0
  %666 = vmatprep.mubr.f32.mxu0 0.0
  %667 = vmatmul.mubr.f32.gmra.mrb[0].mxu0 %v600
  %v668 = vpop.f32.mrb[0].mxu0
  %v669 = vadd.f32 0.0, %v668
  %v670 = vpop.f32.mrb[0].mxu0
  %671 = vdwg.mxu0
  %v672 = vadd.f32 %v154, %v669
  %v673 = vxor.u32 %v672, 2147483648
  %v674 = vmul.f32 %v673, 1.442695
  %v675 = vpow.pop %v674
  %v676 = vadd.f32 %v675, 1.0
  %v677 = vrcp.pop %v676
  %v678 = vmul.f32 1.0, %v677
  %v679 = vadd.f32 %v669, %v269
  %681 = vrot.lane.b32.xlu0 %v679, 64
  %v682 = vpop.permute.xlu0 %681
  %v684 = vmul.f32 %v678, %v682
  %686 = vrot.lane.b32.xlu0 %v684, 64
  %v687 = vpop.permute.xlu0 %686
  %v689 = vadd.f32 %v154, %v687
  %v690 = vtanh.pop %v689
  %v691 = vsub.f32 1.0, %v678
  %693 = vrot.lane.b32.xlu0 %v690, 96
  %v694 = vpop.permute.xlu0 %693
  %v696 = vmul.f32 %v691, %v694
  %v697 = vmul.f32 %v678, %v596
  %v698 = vadd.f32 %v696, %v697
  %700 = vrot.lane.b32.xlu0 %v698, 96
  %v701 = vpop.permute.xlu0 %700
  %v702 = vsel %vm182, %v701, 0
  %704 = vmatprep.subr.mxu0 0.0
  %705 = vmatpush1.msra.mxu0 %v177
  %706 = vmatprep.subr.mxu0 0.0
  %707 = vmatpush1.msra.mxu0 %v178
  %708 = vmatprep.subr.mxu0 0.0
  %709 = vmatpush1.msra.mxu0 %v179
  %710 = vmatprep.subr.mxu0 0.0
  %711 = vmatpush1.msra.mxu0 %v180
  %712 = vmatprep.subr.mxu0 0.0
  %713 = vmatpush1.msra.mxu0 0.0
  %714 = vmatprep.subr.mxu0 0.0
  %715 = vmatpush1.msra.mxu0 0.0
  %716 = vmatprep.subr.mxu0 0.0
  %717 = vmatpush1.msra.mxu0 0.0
  %718 = vmatprep.subr.mxu0 0.0
  %719 = vmatpush1.msra.mxu0 0.0
  %720 = vmatprep.subr.mxu0 0.0
  %721 = vmatpush1.msra.mxu0 0.0
  %722 = vmatprep.subr.mxu0 0.0
  %723 = vmatpush1.msra.mxu0 0.0
  %724 = vmatprep.subr.mxu0 0.0
  %725 = vmatpush1.msra.mxu0 0.0
  %726 = vmatprep.subr.mxu0 0.0
  %727 = vmatpush1.msra.mxu0 0.0
  %728 = vmatprep.subr.mxu0 0.0
  %729 = vmatpush1.msra.mxu0 0.0
  %730 = vmatprep.subr.mxu0 0.0
  %731 = vmatpush1.msra.mxu0 0.0
  %732 = vmatprep.subr.mxu0 0.0
  %733 = vmatpush1.msra.mxu0 0.0
  %734 = vmatprep.subr.mxu0 0.0
  %735 = vmatpush1.msra.mxu0 0.0
  %736 = vmatprep.subr.mxu0 0.0
  %737 = vmatpush1.msra.mxu0 0.0
  %738 = vmatprep.subr.mxu0 0.0
  %739 = vmatpush1.msra.mxu0 0.0
  %740 = vmatprep.subr.mxu0 0.0
  %741 = vmatpush1.msra.mxu0 0.0
  %742 = vmatprep.subr.mxu0 0.0
  %743 = vmatpush1.msra.mxu0 0.0
  %744 = vmatprep.subr.mxu0 0.0
  %745 = vmatpush1.msra.mxu0 0.0
  %746 = vmatprep.subr.mxu0 0.0
  %747 = vmatpush1.msra.mxu0 0.0
  %748 = vmatprep.subr.mxu0 0.0
  %749 = vmatpush1.msra.mxu0 0.0
  %750 = vmatprep.subr.mxu0 0.0
  %751 = vmatpush1.msra.mxu0 0.0
  %752 = vmatprep.subr.mxu0 0.0
  %753 = vmatpush1.msra.mxu0 0.0
  %754 = vmatprep.subr.mxu0 0.0
  %755 = vmatpush1.msra.mxu0 0.0
  %756 = vmatprep.subr.mxu0 0.0
  %757 = vmatpush1.msra.mxu0 0.0
  %758 = vmatprep.subr.mxu0 0.0
  %759 = vmatpush1.msra.mxu0 0.0
  %760 = vmatprep.subr.mxu0 0.0
  %761 = vmatpush1.msra.mxu0 0.0
  %762 = vmatprep.subr.mxu0 0.0
  %763 = vmatpush1.msra.mxu0 0.0
  %764 = vmatprep.subr.mxu0 0.0
  %765 = vmatpush1.msra.mxu0 0.0
  %766 = vmatprep.subr.mxu0 0.0
  %767 = vmatpush1.msra.mxu0 0.0
  %768 = vmatprep.mubr.f32.mxu0 0.0
  %769 = vmatmul.mubr.f32.gmra.mrb[0].mxu0 %v702
  %v770 = vpop.f32.mrb[0].mxu0
  %v771 = vadd.f32 0.0, %v770
  %v772 = vpop.f32.mrb[0].mxu0
  %773 = vdwg.mxu0
  %v774 = vadd.f32 %v149, %v771
  %v775 = vxor.u32 %v774, 2147483648
  %v776 = vmul.f32 %v775, 1.442695
  %v777 = vpow.pop %v776
  %v778 = vadd.f32 %v777, 1.0
  %v779 = vrcp.pop %v778
  %v780 = vmul.f32 1.0, %v779
  %v781 = vadd.f32 %v771, %v269
  %783 = vrot.lane.b32.xlu0 %v781, 64
  %v784 = vpop.permute.xlu0 %783
  %v786 = vmul.f32 %v780, %v784
  %788 = vrot.lane.b32.xlu0 %v786, 64
  %v789 = vpop.permute.xlu0 %788
  %v791 = vadd.f32 %v149, %v789
  %v792 = vtanh.pop %v791
  %v793 = vsub.f32 1.0, %v780
  %795 = vrot.lane.b32.xlu0 %v792, 96
  %v796 = vpop.permute.xlu0 %795
  %v798 = vmul.f32 %v793, %v796
  %v799 = vmul.f32 %v780, %v698
  %v800 = vadd.f32 %v798, %v799
  %802 = vrot.lane.b32.xlu0 %v800, 96
  %v803 = vpop.permute.xlu0 %802
  %v804 = vsel %vm182, %v803, 0
  %806 = vmatprep.subr.mxu0 0.0
  %807 = vmatpush1.msra.mxu0 %v177
  %808 = vmatprep.subr.mxu0 0.0
  %809 = vmatpush1.msra.mxu0 %v178
  %810 = vmatprep.subr.mxu0 0.0
  %811 = vmatpush1.msra.mxu0 %v179
  %812 = vmatprep.subr.mxu0 0.0
  %813 = vmatpush1.msra.mxu0 %v180
  %814 = vmatprep.subr.mxu0 0.0
  %815 = vmatpush1.msra.mxu0 0.0
  %816 = vmatprep.subr.mxu0 0.0
  %817 = vmatpush1.msra.mxu0 0.0
  %818 = vmatprep.subr.mxu0 0.0
  %819 = vmatpush1.msra.mxu0 0.0
  %820 = vmatprep.subr.mxu0 0.0
  %821 = vmatpush1.msra.mxu0 0.0
  %822 = vmatprep.subr.mxu0 0.0
  %823 = vmatpush1.msra.mxu0 0.0
  %824 = vmatprep.subr.mxu0 0.0
  %825 = vmatpush1.msra.mxu0 0.0
  %826 = vmatprep.subr.mxu0 0.0
  %827 = vmatpush1.msra.mxu0 0.0
  %828 = vmatprep.subr.mxu0 0.0
  %829 = vmatpush1.msra.mxu0 0.0
  %830 = vmatprep.subr.mxu0 0.0
  %831 = vmatpush1.msra.mxu0 0.0
  %832 = vmatprep.subr.mxu0 0.0
  %833 = vmatpush1.msra.mxu0 0.0
  %834 = vmatprep.subr.mxu0 0.0
  %835 = vmatpush1.msra.mxu0 0.0
  %836 = vmatprep.subr.mxu0 0.0
  %837 = vmatpush1.msra.mxu0 0.0
  %838 = vmatprep.subr.mxu0 0.0
  %839 = vmatpush1.msra.mxu0 0.0
  %840 = vmatprep.subr.mxu0 0.0
  %841 = vmatpush1.msra.mxu0 0.0
  %842 = vmatprep.subr.mxu0 0.0
  %843 = vmatpush1.msra.mxu0 0.0
  %844 = vmatprep.subr.mxu0 0.0
  %845 = vmatpush1.msra.mxu0 0.0
  %846 = vmatprep.subr.mxu0 0.0
  %847 = vmatpush1.msra.mxu0 0.0
  %848 = vmatprep.subr.mxu0 0.0
  %849 = vmatpush1.msra.mxu0 0.0
  %850 = vmatprep.subr.mxu0 0.0
  %851 = vmatpush1.msra.mxu0 0.0
  %852 = vmatprep.subr.mxu0 0.0
  %853 = vmatpush1.msra.mxu0 0.0
  %854 = vmatprep.subr.mxu0 0.0
  %855 = vmatpush1.msra.mxu0 0.0
  %856 = vmatprep.subr.mxu0 0.0
  %857 = vmatpush1.msra.mxu0 0.0
  %858 = vmatprep.subr.mxu0 0.0
  %859 = vmatpush1.msra.mxu0 0.0
  %860 = vmatprep.subr.mxu0 0.0
  %861 = vmatpush1.msra.mxu0 0.0
  %862 = vmatprep.subr.mxu0 0.0
  %863 = vmatpush1.msra.mxu0 0.0
  %864 = vmatprep.subr.mxu0 0.0
  %865 = vmatpush1.msra.mxu0 0.0
  %866 = vmatprep.subr.mxu0 0.0
  %867 = vmatpush1.msra.mxu0 0.0
  %868 = vmatprep.subr.mxu0 0.0
  %869 = vmatpush1.msra.mxu0 0.0
  %870 = vmatprep.mubr.f32.mxu0 0.0
  %871 = vmatmul.mubr.f32.gmra.mrb[0].mxu0 %v804
  %v872 = vpop.f32.mrb[0].mxu0
  %v873 = vadd.f32 0.0, %v872
  %v874 = vpop.f32.mrb[0].mxu0
  %875 = vdwg.mxu0
  %v876 = vadd.f32 %v144, %v873
  %v877 = vxor.u32 %v876, 2147483648
  %v878 = vmul.f32 %v877, 1.442695
  %v879 = vpow.pop %v878
  %v880 = vadd.f32 %v879, 1.0
  %v881 = vrcp.pop %v880
  %v882 = vmul.f32 1.0, %v881
  %v883 = vadd.f32 %v873, %v269
  %885 = vrot.lane.b32.xlu0 %v883, 64
  %v886 = vpop.permute.xlu0 %885
  %v888 = vmul.f32 %v882, %v886
  %890 = vrot.lane.b32.xlu0 %v888, 64
  %v891 = vpop.permute.xlu0 %890
  %v893 = vadd.f32 %v144, %v891
  %v894 = vtanh.pop %v893
  %v895 = vsub.f32 1.0, %v882
  %897 = vrot.lane.b32.xlu0 %v894, 96
  %v898 = vpop.permute.xlu0 %897
  %v900 = vmul.f32 %v895, %v898
  %v901 = vmul.f32 %v882, %v800
  %v902 = vadd.f32 %v900, %v901
  %904 = vrot.lane.b32.xlu0 %v902, 96
  %v905 = vpop.permute.xlu0 %904
  %v906 = vsel %vm182, %v905, 0
  %908 = vmatprep.subr.mxu0 0.0
  %909 = vmatpush1.msra.mxu0 %v177
  %910 = vmatprep.subr.mxu0 0.0
  %911 = vmatpush1.msra.mxu0 %v178
  %912 = vmatprep.subr.mxu0 0.0
  %913 = vmatpush1.msra.mxu0 %v179
  %914 = vmatprep.subr.mxu0 0.0
  %915 = vmatpush1.msra.mxu0 %v180
  %916 = vmatprep.subr.mxu0 0.0
  %917 = vmatpush1.msra.mxu0 0.0
  %918 = vmatprep.subr.mxu0 0.0
  %919 = vmatpush1.msra.mxu0 0.0
  %920 = vmatprep.subr.mxu0 0.0
  %921 = vmatpush1.msra.mxu0 0.0
  %922 = vmatprep.subr.mxu0 0.0
  %923 = vmatpush1.msra.mxu0 0.0
  %924 = vmatprep.subr.mxu0 0.0
  %925 = vmatpush1.msra.mxu0 0.0
  %926 = vmatprep.subr.mxu0 0.0
  %927 = vmatpush1.msra.mxu0 0.0
  %928 = vmatprep.subr.mxu0 0.0
  %929 = vmatpush1.msra.mxu0 0.0
  %930 = vmatprep.subr.mxu0 0.0
  %931 = vmatpush1.msra.mxu0 0.0
  %932 = vmatprep.subr.mxu0 0.0
  %933 = vmatpush1.msra.mxu0 0.0
  %934 = vmatprep.subr.mxu0 0.0
  %935 = vmatpush1.msra.mxu0 0.0
  %936 = vmatprep.subr.mxu0 0.0
  %937 = vmatpush1.msra.mxu0 0.0
  %938 = vmatprep.subr.mxu0 0.0
  %939 = vmatpush1.msra.mxu0 0.0
  %940 = vmatprep.subr.mxu0 0.0
  %941 = vmatpush1.msra.mxu0 0.0
  %942 = vmatprep.subr.mxu0 0.0
  %943 = vmatpush1.msra.mxu0 0.0
  %944 = vmatprep.subr.mxu0 0.0
  %945 = vmatpush1.msra.mxu0 0.0
  %946 = vmatprep.subr.mxu0 0.0
  %947 = vmatpush1.msra.mxu0 0.0
  %948 = vmatprep.subr.mxu0 0.0
  %949 = vmatpush1.msra.mxu0 0.0
  %950 = vmatprep.subr.mxu0 0.0
  %951 = vmatpush1.msra.mxu0 0.0
  %952 = vmatprep.subr.mxu0 0.0
  %953 = vmatpush1.msra.mxu0 0.0
  %954 = vmatprep.subr.mxu0 0.0
  %955 = vmatpush1.msra.mxu0 0.0
  %956 = vmatprep.subr.mxu0 0.0
  %957 = vmatpush1.msra.mxu0 0.0
  %958 = vmatprep.subr.mxu0 0.0
  %959 = vmatpush1.msra.mxu0 0.0
  %960 = vmatprep.subr.mxu0 0.0
  %961 = vmatpush1.msra.mxu0 0.0
  %962 = vmatprep.subr.mxu0 0.0
  %963 = vmatpush1.msra.mxu0 0.0
  %964 = vmatprep.subr.mxu0 0.0
  %965 = vmatpush1.msra.mxu0 0.0
  %966 = vmatprep.subr.mxu0 0.0
  %967 = vmatpush1.msra.mxu0 0.0
  %968 = vmatprep.subr.mxu0 0.0
  %969 = vmatpush1.msra.mxu0 0.0
  %970 = vmatprep.subr.mxu0 0.0
  %971 = vmatpush1.msra.mxu0 0.0
  %972 = vmatprep.mubr.f32.mxu0 0.0
  %973 = vmatmul.mubr.f32.gmra.mrb[0].mxu0 %v906
  %v974 = vpop.f32.mrb[0].mxu0
  %v975 = vadd.f32 0.0, %v974
  %v976 = vpop.f32.mrb[0].mxu0
  %977 = vdwg.mxu0
  %v978 = vadd.f32 %v139, %v975
  %v979 = vxor.u32 %v978, 2147483648
  %v980 = vmul.f32 %v979, 1.442695
  %v981 = vpow.pop %v980
  %v982 = vadd.f32 %v981, 1.0
  %v983 = vrcp.pop %v982
  %v984 = vmul.f32 1.0, %v983
  %v985 = vadd.f32 %v975, %v269
  %987 = vrot.lane.b32.xlu0 %v985, 64
  %v988 = vpop.permute.xlu0 %987
  %v990 = vmul.f32 %v984, %v988
  %992 = vrot.lane.b32.xlu0 %v990, 64
  %v993 = vpop.permute.xlu0 %992
  %v995 = vadd.f32 %v139, %v993
  %v996 = vtanh.pop %v995
  %v997 = vsub.f32 1.0, %v984
  %999 = vrot.lane.b32.xlu0 %v996, 96
  %v1000 = vpop.permute.xlu0 %999
  %v1002 = vmul.f32 %v997, %v1000
  %v1003 = vmul.f32 %v984, %v902
  %v1004 = vadd.f32 %v1002, %v1003
  %v1005 = vld [vmem:[%s5] sm:$0xff]
  %v1006 = vld [vmem:[%s5 + $0x8] sm:$0xff]
  %v1007 = vld [vmem:[%s5 + $0x10] sm:$0xff]
  %v1008 = vld [vmem:[%s5 + $0x18] sm:$0xff]
  %v1009 = vld [vmem:[%s6] sm:$0x1]
  %v1011 = vlaneseq
  %v1012 = vshrl.u32 %v1011, 7
  %v1013 = vsub.s32 0, %v1012
  %v1014 = vrot.slane %v1009, %v1013
  %1017 = vrot.lane.b32.xlu0 %v1004, 96
  %v1018 = vpop.permute.xlu0 %1017
  %v1019 = vsel %vm182, %v1018, 0
  %1021 = vmatprep.subr.mxu0 0.0
  %1022 = vmatpush1.msra.mxu0 %v1005
  %1023 = vmatprep.subr.mxu0 0.0
  %1024 = vmatpush1.msra.mxu0 %v1006
  %1025 = vmatprep.subr.mxu0 0.0
  %1026 = vmatpush1.msra.mxu0 %v1007
  %1027 = vmatprep.subr.mxu0 0.0
  %1028 = vmatpush1.msra.mxu0 %v1008
  %1029 = vmatprep.subr.mxu0 0.0
  %1030 = vmatpush1.msra.mxu0 0.0
  %1031 = vmatprep.subr.mxu0 0.0
  %1032 = vmatpush1.msra.mxu0 0.0
  %1033 = vmatprep.subr.mxu0 0.0
  %1034 = vmatpush1.msra.mxu0 0.0
  %1035 = vmatprep.subr.mxu0 0.0
  %1036 = vmatpush1.msra.mxu0 0.0
  %1037 = vmatprep.subr.mxu0 0.0
  %1038 = vmatpush1.msra.mxu0 0.0
  %1039 = vmatprep.subr.mxu0 0.0
  %1040 = vmatpush1.msra.mxu0 0.0
  %1041 = vmatprep.subr.mxu0 0.0
  %1042 = vmatpush1.msra.mxu0 0.0
  %1043 = vmatprep.subr.mxu0 0.0
  %1044 = vmatpush1.msra.mxu0 0.0
  %1045 = vmatprep.subr.mxu0 0.0
  %1046 = vmatpush1.msra.mxu0 0.0
  %1047 = vmatprep.subr.mxu0 0.0
  %1048 = vmatpush1.msra.mxu0 0.0
  %1049 = vmatprep.subr.mxu0 0.0
  %1050 = vmatpush1.msra.mxu0 0.0
  %1051 = vmatprep.subr.mxu0 0.0
  %1052 = vmatpush1.msra.mxu0 0.0
  %1053 = vmatprep.subr.mxu0 0.0
  %1054 = vmatpush1.msra.mxu0 0.0
  %1055 = vmatprep.subr.mxu0 0.0
  %1056 = vmatpush1.msra.mxu0 0.0
  %1057 = vmatprep.subr.mxu0 0.0
  %1058 = vmatpush1.msra.mxu0 0.0
  %1059 = vmatprep.subr.mxu0 0.0
  %1060 = vmatpush1.msra.mxu0 0.0
  %1061 = vmatprep.subr.mxu0 0.0
  %1062 = vmatpush1.msra.mxu0 0.0
  %1063 = vmatprep.subr.mxu0 0.0
  %1064 = vmatpush1.msra.mxu0 0.0
  %1065 = vmatprep.subr.mxu0 0.0
  %1066 = vmatpush1.msra.mxu0 0.0
  %1067 = vmatprep.subr.mxu0 0.0
  %1068 = vmatpush1.msra.mxu0 0.0
  %1069 = vmatprep.subr.mxu0 0.0
  %1070 = vmatpush1.msra.mxu0 0.0
  %1071 = vmatprep.subr.mxu0 0.0
  %1072 = vmatpush1.msra.mxu0 0.0
  %1073 = vmatprep.subr.mxu0 0.0
  %1074 = vmatpush1.msra.mxu0 0.0
  %1075 = vmatprep.subr.mxu0 0.0
  %1076 = vmatpush1.msra.mxu0 0.0
  %1077 = vmatprep.subr.mxu0 0.0
  %1078 = vmatpush1.msra.mxu0 0.0
  %1079 = vmatprep.subr.mxu0 0.0
  %1080 = vmatpush1.msra.mxu0 0.0
  %1081 = vmatprep.subr.mxu0 0.0
  %1082 = vmatpush1.msra.mxu0 0.0
  %1083 = vmatprep.subr.mxu0 0.0
  %1084 = vmatpush1.msra.mxu0 0.0
  %1085 = vmatprep.mubr.f32.mxu0 0.0
  %1086 = vmatmul.mubr.f32.gmra.mrb[0].mxu0 %v1019
  %v1087 = vpop.f32.mrb[0].mxu0
  %v1088 = vadd.f32 %v1014, %v1087
  %v1089 = vpop.f32.mrb[0].mxu0
  %1090 = vdwg.mxu0
  %vm1091 = vcmask 97280
  %1092 = vst.msk [vmem:[%s7] sm:$0xff] %vm1091, %v1088
  // Predicated region
  $region30: #{rnn_encoder_forward.1} parent=0 // pred_check
    _
  $region31: #{rnn_encoder_forward.1} parent=0 // pred_check_branch
    %1094 = sbr.rel (0) target = $region33
  $region32: #{rnn_encoder_forward.1} parent=0 // pred_region
    _
  $region33: #{rnn_encoder_forward.1} parent=0 // pred_fallthru
    _
  // Predicated region
  $region34: #{rnn_encoder_forward.1} parent=0 // pred_check
    _
  $region35: #{rnn_encoder_forward.1} parent=0 // pred_check_branch
    %1096 = sbr.rel (0) target = $region37
  $region36: #{rnn_encoder_forward.1} parent=0 // pred_region
    _
  $region37: #{rnn_encoder_forward.1} parent=0 // pred_fallthru
    _

</llo_original>
